<compile_context>
chip_gen: v7x
topology: tpu7x:2x2x1
jax: 0.10.0
libtpu: 0.0.40
codegen_flags: <defaults>
</compile_context>

<pallas_src>
import jax
import jax.numpy as jnp
from jax.experimental import pallas as pl
from jax.experimental.pallas import tpu as pltpu


def _round_up(n, m):
    return ((n + m - 1) // m) * m


def _num_tensorcores():
    """TensorCores per JAX device (megacore chips v4 / v5p / v7x -> 2)."""
    try:
        kind = jax.devices()[0].device_kind.lower()
    except Exception:
        return 1
    if ("v4" in kind) or ("v5p" in kind) or ("v7" in kind) or ("tpu7" in kind):
        return 2
    return 1


def _is_bf16_native():
    """bf16-native VPU/MXU generations (v6e and newer)."""
    try:
        kind = jax.devices()[0].device_kind.lower()
    except Exception:
        return False
    return ("v6" in kind) or ("v7" in kind) or ("tpu7" in kind)


def _pick_tb(B, num_cores):
    """Batch tile: whole (8-rounded) batch on single-TC chips when it fits,
    split across TensorCores on megacore chips, capped at 256 rows (>= ~85% of
    HBM roofline per tile while keeping double-buffered VMEM bounded)."""
    if num_cores > 1:
        tb = _round_up(pl.cdiv(B, num_cores), 8)   # >= num_cores grid steps
    else:
        tb = _round_up(B, 8)                       # grid=(1,) when small
    return max(8, min(tb, 256))


def _vmem_bytes_estimate(tb, in_pad, C, out_pad, weight_itemsize, weight_buffers):
    f32 = 4
    # double-buffered streaming tiles (x input + three outputs)
    io = 2 * tb * in_pad * f32 + 2 * (tb * C + 2 * tb * out_pad) * f32
    # constant operands (weights / biases / averaging matrix)
    consts = weight_buffers * ((in_pad * C + C * out_pad) * weight_itemsize
                               + (4 * C + out_pad + C * C) * f32)
    # live in-kernel intermediates (h, h*h, mean, inv, hn, logits, exp)
    live = 7 * tb * max(C, out_pad) * f32
    return io + consts + live


def cls_forward(x, params, *, tb=None, use_bf16_matmul=None,
                single_buffer_weights=None):
    B, in_dim = x.shape
    C = params["w1"].shape[1]
    out_dim = params["w2"].shape[1]

    num_cores = _num_tensorcores()
    if tb is None:
        tb = _pick_tb(B, num_cores)
    tb = max(8, _round_up(tb, 8))

    # Pad every awkward dimension instead of widening the tile:
    #   batch  -> multiple of tb   (replaces the old tb=B fallback)
    #   in_dim -> multiple of 128  (lane-dense x loads / full MXU K depth)
    #   out    -> multiple of 128  (unmasked vst for logits / probs)
    B_pad = _round_up(B, tb)
    in_pad = _round_up(in_dim, 128)
    out_pad = max(128, _round_up(out_dim, 128))

    # bf16 matmul operands only pay off on bf16-native MXUs (v6e/v7x) and only
    # once the kernel is MXU-bound; GroupNorm stats / normalization stay f32.
    if use_bf16_matmul is None:
        use_bf16_matmul = _is_bf16_native() and (
            in_pad >= 2048 or (B_pad >= 1024 and in_pad >= 512))
    w_dtype = jnp.bfloat16 if use_bf16_matmul else jnp.float32

    xp = jnp.pad(x, ((0, B_pad - B), (0, in_pad - in_dim)))
    w1p = jnp.pad(params["w1"], ((0, in_pad - in_dim), (0, 0))).astype(w_dtype)
    w2p = jnp.pad(params["w2"], ((0, 0), (0, out_pad - out_dim))).astype(w_dtype)
    # padded logits columns carry -1e30 bias -> zero softmax mass
    b2p = jnp.pad(params["b2"], ((0, 0), (0, out_pad - out_dim)),
                  constant_values=-1e30)

    weight_itemsize = 2 if use_bf16_matmul else 4
    const_bytes = ((in_pad * C + C * out_pad) * weight_itemsize
                   + (4 * C + out_pad + C * C) * 4)
    if single_buffer_weights is None:
        # Single-buffer the constant operands only once they are big enough to
        # matter; keeps the common small-shape path on the vanilla pipeline.
        single_buffer_weights = const_bytes > (2 << 20)
    weight_buffers = 1 if single_buffer_weights else 2

    def const_spec(shape):
        # Constant operands: index_map is constant so they are fetched once.
        if single_buffer_weights:
            return pl.BlockSpec(shape, lambda i: (0, 0),
                                pipeline_mode=pl.Buffered(1))
        return pl.BlockSpec(shape, lambda i: (0, 0))

    vmem_est = _vmem_bytes_estimate(tb, in_pad, C, out_pad,
                                    weight_itemsize, weight_buffers)
    # Default scoped-VMEM limit is 16 MiB (v5e) / 32 MiB (v6e, v7x); raise it
    # explicitly (capped below v7x's 64 MiB physical) when the estimate says so.
    vmem_limit = None
    if vmem_est > (16 << 20):
        vmem_limit = int(min(vmem_est * 1.25 + (2 << 20), 60 << 20))

    def kernel(x_ref, w1_ref, b1_ref, gnw_ref, gnb_ref, w2_ref, b2_ref,
               gavg_ref, hgn_ref, logits_ref, probs_ref):
        x_t = x_ref[...]                                          # (tb, in_pad)
        if use_bf16_matmul:
            x_t = x_t.astype(jnp.bfloat16)

        # --- bottleneck Linear ---
        h = jnp.dot(x_t, w1_ref[...],
                    preferred_element_type=jnp.float32) + b1_ref[...]

        # --- GroupNorm(32, C), eps=1e-5, affine ---
        # gavg is the (C, C) block-diagonal per-group averaging matrix, so a
        # full-width MXU matmul yields per-channel E[h] / E[h^2] directly
        # (no narrow G-wide stats + scatter matmuls, no (2*tb, C) concat temp).
        mean_c = jnp.dot(h, gavg_ref[...], preferred_element_type=jnp.float32)
        ex2_c = jnp.dot(h * h, gavg_ref[...],
                        preferred_element_type=jnp.float32)
        # TODO(synk): single-pass E[h^2]-E[h]^2 can lose precision if this head
        # ever sees unnormalized large-mean activations; clamp guards NaN only.
        var_c = jnp.maximum(ex2_c - mean_c * mean_c, 0.0)
        inv_c = jax.lax.rsqrt(var_c + 1e-5)
        hn = (h - mean_c) * inv_c * gnw_ref[...] + gnb_ref[...]
        hgn_ref[...] = hn

        # --- fc Linear (lane-padded cols: zero weights, -1e30 bias) ---
        hn_mm = hn.astype(jnp.bfloat16) if use_bf16_matmul else hn
        logits = jnp.dot(hn_mm, w2_ref[...],
                         preferred_element_type=jnp.float32) + b2_ref[...]
        logits_ref[...] = logits

        # --- softmax(dim=-1); padded columns get exp(-huge) = 0 mass ---
        m = jnp.max(logits, axis=-1, keepdims=True)
        e = jnp.exp(logits - m)
        probs_ref[...] = e / jnp.sum(e, axis=-1, keepdims=True)

    hgn, logits_p, probs_p = pl.pallas_call(
        kernel,
        out_shape=(
            jax.ShapeDtypeStruct((B_pad, C), jnp.float32),
            jax.ShapeDtypeStruct((B_pad, out_pad), jnp.float32),
            jax.ShapeDtypeStruct((B_pad, out_pad), jnp.float32),
        ),
        grid=(B_pad // tb,),
        in_specs=[
            pl.BlockSpec((tb, in_pad), lambda i: (i, 0)),   # x tile
            const_spec((in_pad, C)),                        # W1
            const_spec((1, C)),                             # b1
            const_spec((1, C)),                             # gn weight
            const_spec((1, C)),                             # gn bias
            const_spec((C, out_pad)),                       # W2 (lane-padded)
            const_spec((1, out_pad)),                       # b2 (lane-padded)
            const_spec((C, C)),                             # per-group averaging
        ],
        out_specs=(
            pl.BlockSpec((tb, C), lambda i: (i, 0)),
            pl.BlockSpec((tb, out_pad), lambda i: (i, 0)),
            pl.BlockSpec((tb, out_pad), lambda i: (i, 0)),
        ),
        compiler_params=pltpu.CompilerParams(
            dimension_semantics=("parallel",),
            vmem_limit_bytes=vmem_limit),
    )(xp, w1p, params["b1"], params["gnw"], params["gnb"],
      w2p, b2p, params["gavg"])

    # TODO(synk): on v5e at large B the 128-wide pad inflates logits/probs HBM
    # writeback ~8x for tiny out_dim; packing both outputs (or storing logits
    # at true width with a masked vst) would trade stores for less writeback.

    # out[0] is the untouched input, exactly as in the PyTorch module.
    return [x, hgn[:B], logits_p[:B, :out_dim], probs_p[:B, :out_dim]]


def cls_reference(x, params, groups=32):
    """Pure-JAX reference matching nn.Linear / nn.GroupNorm / softmax."""
    h = x @ params["w1"] + params["b1"]
    B, C = h.shape
    hg = h.reshape(B, groups, C // groups)
    mean = hg.mean(-1, keepdims=True)
    var = hg.var(-1, keepdims=True)               # biased, like torch GroupNorm
    hn = ((hg - mean) / jnp.sqrt(var + 1e-5)).reshape(B, C)
    hn = hn * params["gnw"] + params["gnb"]
    logits = hn @ params["w2"] + params["b2"]
    probs = jax.nn.softmax(logits, axis=-1)
    return [x, hn, logits, probs]


def init_params(key, in_dim, out_dim, bottle_neck_dim=256, groups=32):
    k1, k2, k3, k4 = jax.random.split(key, 4)
    C = bottle_neck_dim
    group_size = C // groups
    same_group = (jnp.arange(C)[:, None] // group_size
                  == jnp.arange(C)[None, :] // group_size)
    params = {
        "w1": jax.random.normal(k1, (in_dim, C), jnp.float32) * 0.05,
        "b1": jax.random.normal(k2, (1, C), jnp.float32) * 0.05,
        # nn.GroupNorm default affine init: weight=1, bias=0
        "gnw": jnp.ones((1, C), jnp.float32),
        "gnb": jnp.zeros((1, C), jnp.float32),
        "w2": jax.random.normal(k3, (C, out_dim), jnp.float32) * 0.05,
        "b2": jax.random.normal(k4, (1, out_dim), jnp.float32) * 0.05,
        # block-diagonal per-group averaging matrix: (h @ gavg)[b,c] = E_group(c)[h]
        "gavg": same_group.astype(jnp.float32) / group_size,
    }
    return params
    # TODO(synk): self.bn (BatchNorm1d) and self.main (Sequential) are defined
    # in __init__ but never used in forward(), so they are intentionally omitted.


if __name__ == "__main__":
    B, in_dim, out_dim = 16, 64, 16
    key = jax.random.PRNGKey(0)
    kx, kp = jax.random.split(key)
    x = jax.random.normal(kx, (B, in_dim), jnp.float32)
    params = init_params(kp, in_dim, out_dim, bottle_neck_dim=256, groups=32)

    outs = jax.block_until_ready(cls_forward(x, params))
    refs = cls_reference(x, params, groups=32)

    for o, r in zip(outs, refs):
        assert o.shape == r.shape and o.dtype == r.dtype
        assert jnp.allclose(o, r, atol=3e-5, rtol=3e-5), float(jnp.max(jnp.abs(o - r)))

    print("KERNEL_OK")
</pallas_src>

<mosaic_0001>
module attributes {stable_mosaic.version = 11 : i64} {
  func.func @kernel(%arg0: i32, %arg1: memref<16x128xf32, #tpu.memory_space<vmem>>, %arg2: memref<128x256xf32, #tpu.memory_space<vmem>>, %arg3: memref<1x256xf32, #tpu.memory_space<vmem>>, %arg4: memref<1x256xf32, #tpu.memory_space<vmem>>, %arg5: memref<1x256xf32, #tpu.memory_space<vmem>>, %arg6: memref<256x128xf32, #tpu.memory_space<vmem>>, %arg7: memref<1x128xf32, #tpu.memory_space<vmem>>, %arg8: memref<256x256xf32, #tpu.memory_space<vmem>>, %arg9: memref<16x256xf32, #tpu.memory_space<vmem>>, %arg10: memref<16x128xf32, #tpu.memory_space<vmem>>, %arg11: memref<16x128xf32, #tpu.memory_space<vmem>>) attributes {dimension_semantics = [#tpu.dimension_semantics<parallel>], iteration_bounds = array<i64: 1>, scalar_prefetch = 0 : i64, scratch_operands = 0 : i64, tpu.core_type = #tpu.core_type<tc>, window_params = [{transform_indices = @transform_0, window_bounds = array<i64: 16, 128>}, {pipeline_mode = #tpu.pipeline_mode<synchronous>, transform_indices = @transform_1, window_bounds = array<i64: 128, 256>}, {pipeline_mode = #tpu.pipeline_mode<synchronous>, transform_indices = @transform_2, window_bounds = array<i64: 1, 256>}, {pipeline_mode = #tpu.pipeline_mode<synchronous>, transform_indices = @transform_3, window_bounds = array<i64: 1, 256>}, {pipeline_mode = #tpu.pipeline_mode<synchronous>, transform_indices = @transform_4, window_bounds = array<i64: 1, 256>}, {pipeline_mode = #tpu.pipeline_mode<synchronous>, transform_indices = @transform_5, window_bounds = array<i64: 256, 128>}, {pipeline_mode = #tpu.pipeline_mode<synchronous>, transform_indices = @transform_6, window_bounds = array<i64: 1, 128>}, {pipeline_mode = #tpu.pipeline_mode<synchronous>, transform_indices = @transform_7, window_bounds = array<i64: 256, 256>}, {transform_indices = @transform_8, window_bounds = array<i64: 16, 256>}, {transform_indices = @transform_9, window_bounds = array<i64: 16, 128>}, {transform_indices = @transform_10, window_bounds = array<i64: 16, 128>}]} {
    %c0 = arith.constant 0 : index
    %c0_0 = arith.constant 0 : index
    %0 = vector.load %arg1[%c0, %c0_0] : memref<16x128xf32, #tpu.memory_space<vmem>>, vector<16x128xf32>
    %c0_1 = arith.constant 0 : index
    %c0_2 = arith.constant 0 : index
    %1 = vector.load %arg2[%c0_1, %c0_2] : memref<128x256xf32, #tpu.memory_space<vmem>>, vector<128x256xf32>
    %cst = arith.constant dense<0.000000e+00> : vector<16x256xf32>
    %2 = tpu.matmul %0, %1, %cst {dimension_numbers = #tpu.dot_dimension_numbers<[1], [0], [0], [1], [0, 0, 1, 1], [], []>} : vector<16x128xf32>, vector<128x256xf32>, vector<16x256xf32> -> vector<16x256xf32>
    %c0_3 = arith.constant 0 : index
    %c0_4 = arith.constant 0 : index
    %3 = vector.load %arg3[%c0_3, %c0_4] : memref<1x256xf32, #tpu.memory_space<vmem>>, vector<1x256xf32>
    %4 = vector.broadcast %3 : vector<1x256xf32> to vector<16x256xf32>
    %5 = arith.addf %2, %4 : vector<16x256xf32>
    %c0_5 = arith.constant 0 : index
    %c0_6 = arith.constant 0 : index
    %6 = vector.load %arg8[%c0_5, %c0_6] : memref<256x256xf32, #tpu.memory_space<vmem>>, vector<256x256xf32>
    %cst_7 = arith.constant dense<0.000000e+00> : vector<16x256xf32>
    %7 = tpu.matmul %5, %6, %cst_7 {dimension_numbers = #tpu.dot_dimension_numbers<[1], [0], [0], [1], [0, 0, 1, 1], [], []>} : vector<16x256xf32>, vector<256x256xf32>, vector<16x256xf32> -> vector<16x256xf32>
    %8 = arith.mulf %5, %5 : vector<16x256xf32>
    %c0_8 = arith.constant 0 : index
    %c0_9 = arith.constant 0 : index
    %9 = vector.load %arg8[%c0_8, %c0_9] : memref<256x256xf32, #tpu.memory_space<vmem>>, vector<256x256xf32>
    %cst_10 = arith.constant dense<0.000000e+00> : vector<16x256xf32>
    %10 = tpu.matmul %8, %9, %cst_10 {dimension_numbers = #tpu.dot_dimension_numbers<[1], [0], [0], [1], [0, 0, 1, 1], [], []>} : vector<16x256xf32>, vector<256x256xf32>, vector<16x256xf32> -> vector<16x256xf32>
    %11 = arith.mulf %7, %7 : vector<16x256xf32>
    %12 = arith.subf %10, %11 : vector<16x256xf32>
    %cst_11 = arith.constant 0.000000e+00 : f32
    %13 = vector.broadcast %cst_11 : f32 to vector<16x256xf32>
    %14 = arith.maximumf %12, %13 : vector<16x256xf32>
    %cst_12 = arith.constant 9.99999974E-6 : f32
    %15 = vector.broadcast %cst_12 : f32 to vector<16x256xf32>
    %16 = arith.addf %14, %15 : vector<16x256xf32>
    %17 = math.rsqrt %16 : vector<16x256xf32>
    %18 = arith.subf %5, %7 : vector<16x256xf32>
    %19 = arith.mulf %18, %17 : vector<16x256xf32>
    %c0_13 = arith.constant 0 : index
    %c0_14 = arith.constant 0 : index
    %20 = vector.load %arg4[%c0_13, %c0_14] : memref<1x256xf32, #tpu.memory_space<vmem>>, vector<1x256xf32>
    %21 = vector.broadcast %20 : vector<1x256xf32> to vector<16x256xf32>
    %22 = arith.mulf %19, %21 : vector<16x256xf32>
    %c0_15 = arith.constant 0 : index
    %c0_16 = arith.constant 0 : index
    %23 = vector.load %arg5[%c0_15, %c0_16] : memref<1x256xf32, #tpu.memory_space<vmem>>, vector<1x256xf32>
    %24 = vector.broadcast %23 : vector<1x256xf32> to vector<16x256xf32>
    %25 = arith.addf %22, %24 : vector<16x256xf32>
    %c0_17 = arith.constant 0 : index
    %c0_18 = arith.constant 0 : index
    %26 = vector.load %arg9[%c0_17, %c0_18] : memref<16x256xf32, #tpu.memory_space<vmem>>, vector<16x256xf32>
    tpu.vector_store %arg9[%c0_17, %c0_18], %25 {strides = array<i32>} : memref<16x256xf32, #tpu.memory_space<vmem>>, vector<16x256xf32>,
    %c0_19 = arith.constant 0 : index
    %c0_20 = arith.constant 0 : index
    %27 = vector.load %arg6[%c0_19, %c0_20] : memref<256x128xf32, #tpu.memory_space<vmem>>, vector<256x128xf32>
    %cst_21 = arith.constant dense<0.000000e+00> : vector<16x128xf32>
    %28 = tpu.matmul %25, %27, %cst_21 {dimension_numbers = #tpu.dot_dimension_numbers<[1], [0], [0], [1], [0, 0, 1, 1], [], []>} : vector<16x256xf32>, vector<256x128xf32>, vector<16x128xf32> -> vector<16x128xf32>
    %c0_22 = arith.constant 0 : index
    %c0_23 = arith.constant 0 : index
    %29 = vector.load %arg7[%c0_22, %c0_23] : memref<1x128xf32, #tpu.memory_space<vmem>>, vector<1x128xf32>
    %30 = vector.broadcast %29 : vector<1x128xf32> to vector<16x128xf32>
    %31 = arith.addf %28, %30 : vector<16x128xf32>
    %c0_24 = arith.constant 0 : index
    %c0_25 = arith.constant 0 : index
    %32 = vector.load %arg10[%c0_24, %c0_25] : memref<16x128xf32, #tpu.memory_space<vmem>>, vector<16x128xf32>
    tpu.vector_store %arg10[%c0_24, %c0_25], %31 {strides = array<i32>} : memref<16x128xf32, #tpu.memory_space<vmem>>, vector<16x128xf32>,
    %cst_26 = arith.constant dense<0xFF800000> : vector<16xf32>
    %33 = vector.multi_reduction <maximumf>, %31, %cst_26 [1] : vector<16x128xf32> to vector<16xf32>
    %34 = vector.shape_cast %33 : vector<16xf32> to vector<16x1xf32>
    %35 = vector.broadcast %34 : vector<16x1xf32> to vector<16x128xf32>
    %36 = arith.subf %31, %35 : vector<16x128xf32>
    %37 = math.exp %36 : vector<16x128xf32>
    %cst_27 = arith.constant dense<0.000000e+00> : vector<16xf32>
    %38 = vector.multi_reduction <add>, %37, %cst_27 [1] : vector<16x128xf32> to vector<16xf32>
    %39 = vector.shape_cast %38 : vector<16xf32> to vector<16x1xf32>
    %40 = vector.broadcast %39 : vector<16x1xf32> to vector<16x128xf32>
    %41 = arith.divf %37, %40 : vector<16x128xf32>
    %c0_28 = arith.constant 0 : index
    %c0_29 = arith.constant 0 : index
    %42 = vector.load %arg11[%c0_28, %c0_29] : memref<16x128xf32, #tpu.memory_space<vmem>>, vector<16x128xf32>
    tpu.vector_store %arg11[%c0_28, %c0_29], %41 {strides = array<i32>} : memref<16x128xf32, #tpu.memory_space<vmem>>, vector<16x128xf32>,
    return
  }
  func.func @transform_0(%arg0: i32) -> (i32, i32) {
    %c0_i32 = arith.constant 0 : i32
    %c0_i32_0 = arith.constant 0 : i32
    return %arg0, %c0_i32 : i32, i32
  }
  func.func @transform_1(%arg0: i32) -> (i32, i32) {
    %c0_i32 = arith.constant 0 : i32
    %c0_i32_0 = arith.constant 0 : i32
    %c0_i32_1 = arith.constant 0 : i32
    return %c0_i32, %c0_i32_0 : i32, i32
  }
  func.func @transform_2(%arg0: i32) -> (i32, i32) {
    %c0_i32 = arith.constant 0 : i32
    %c0_i32_0 = arith.constant 0 : i32
    %c0_i32_1 = arith.constant 0 : i32
    return %c0_i32, %c0_i32_0 : i32, i32
  }
  func.func @transform_3(%arg0: i32) -> (i32, i32) {
    %c0_i32 = arith.constant 0 : i32
    %c0_i32_0 = arith.constant 0 : i32
    %c0_i32_1 = arith.constant 0 : i32
    return %c0_i32, %c0_i32_0 : i32, i32
  }
  func.func @transform_4(%arg0: i32) -> (i32, i32) {
    %c0_i32 = arith.constant 0 : i32
    %c0_i32_0 = arith.constant 0 : i32
    %c0_i32_1 = arith.constant 0 : i32
    return %c0_i32, %c0_i32_0 : i32, i32
  }
  func.func @transform_5(%arg0: i32) -> (i32, i32) {
    %c0_i32 = arith.constant 0 : i32
    %c0_i32_0 = arith.constant 0 : i32
    %c0_i32_1 = arith.constant 0 : i32
    return %c0_i32, %c0_i32_0 : i32, i32
  }
  func.func @transform_6(%arg0: i32) -> (i32, i32) {
    %c0_i32 = arith.constant 0 : i32
    %c0_i32_0 = arith.constant 0 : i32
    %c0_i32_1 = arith.constant 0 : i32
    return %c0_i32, %c0_i32_0 : i32, i32
  }
  func.func @transform_7(%arg0: i32) -> (i32, i32) {
    %c0_i32 = arith.constant 0 : i32
    %c0_i32_0 = arith.constant 0 : i32
    %c0_i32_1 = arith.constant 0 : i32
    return %c0_i32, %c0_i32_0 : i32, i32
  }
  func.func @transform_8(%arg0: i32) -> (i32, i32) {
    %c0_i32 = arith.constant 0 : i32
    %c0_i32_0 = arith.constant 0 : i32
    return %arg0, %c0_i32 : i32, i32
  }
  func.func @transform_9(%arg0: i32) -> (i32, i32) {
    %c0_i32 = arith.constant 0 : i32
    %c0_i32_0 = arith.constant 0 : i32
    return %arg0, %c0_i32 : i32, i32
  }
  func.func @transform_10(%arg0: i32) -> (i32, i32) {
    %c0_i32 = arith.constant 0 : i32
    %c0_i32_0 = arith.constant 0 : i32
    return %arg0, %c0_i32 : i32, i32
  }
}

</mosaic_0001>

<llo_original>
// kernel: tpu_custom_call.1
$region0: #{tpu_custom_call.1}
  #allocation0 [shape = 'u32[]', space=smem, size = 0x4, offset = 0x4, fixed_abs, tag = 'smem constant byte address 0x4 - core index']
  #allocation1 [shape = 'u32[144,128]{1,0:T(1,128)}', space=vmem, size = 0x12000, scoped, tag = 'internal scratch']
  %s0 = inlined_call_operand.hbm [shape: f32[16,128], index: 0, kind: input, shape index: {}]
  %s1 = inlined_call_operand.hbm [shape: f32[128,256], index: 1, kind: input, shape index: {}]
  %s2 = inlined_call_operand.vmem [shape: f32[1,256], index: 2, kind: input, shape index: {}]
  %s3 = inlined_call_operand.vmem [shape: f32[1,256], index: 3, kind: input, shape index: {}]
  %s4 = inlined_call_operand.vmem [shape: f32[1,256], index: 4, kind: input, shape index: {}]
  %s5 = inlined_call_operand.hbm [shape: f32[256,128], index: 5, kind: input, shape index: {}]
  %s6 = inlined_call_operand.vmem [shape: f32[1,128], index: 6, kind: input, shape index: {}]
  %s7 = inlined_call_operand.hbm [shape: f32[256,256], index: 7, kind: input, shape index: {}]
  %s8 = inlined_call_operand.hbm [shape: f32[16,256], index: 8, kind: output, shape index: {0}]
  %s9 = inlined_call_operand.hbm [shape: f32[16,128], index: 9, kind: output, shape index: {1}]
  %s10 = inlined_call_operand.hbm [shape: f32[16,128], index: 10, kind: output, shape index: {2}]
  %11 = xla_tuple %s8, %s9, %s10
  %s12 = sld [smem:[#allocation0]]
  $region74: #{tpu_custom_call.1} parent=0
    _
  %s14 = ssub.s32 1, %s12
  %s15 = scalar_select 0, %s14, %s12
  $region1: #{tpu_custom_call.1} parent=0
    #allocation2 [shape = 'u8[8192]{0}', space=vmem, size = 0x2000, scoped, tag = 'input window, operand 0, single buffered']
    #allocation3 [shape = 's32[1]{0}', space=sflag, size = 0x4, scoped, tag = 'scoped memory for tpu_custom_call.1']
    #allocation4 [shape = 's32[1]{0}', space=sflag, size = 0x4, scoped, tag = 'scoped memory for tpu_custom_call.1']
    #allocation5 [shape = 'u8[131072]{0}', space=vmem, size = 0x20000, scoped, tag = 'input window, operand 1, single buffered']
    #allocation6 [shape = 's32[1]{0}', space=sflag, size = 0x4, scoped, tag = 'scoped memory for tpu_custom_call.1']
    #allocation7 [shape = 'u8[131072]{0}', space=vmem, size = 0x20000, scoped, tag = 'input window, operand 5, single buffered']
    #allocation8 [shape = 'u8[262144]{0}', space=vmem, size = 0x40000, scoped, tag = 'input window, operand 7, single buffered']
    #allocation9 [shape = 's32[1]{0}', space=sflag, size = 0x4, scoped, tag = 'scoped memory for tpu_custom_call.1']
    #allocation10 [shape = 'u8[16384]{0}', space=vmem, size = 0x4000, scoped, tag = 'output window, operand 0, single buffered']
    #allocation11 [shape = 'u8[8192]{0}', space=vmem, size = 0x2000, scoped, tag = 'output window, operand 1, single buffered']
    #allocation12 [shape = 's32[1]{0}', space=sflag, size = 0x4, scoped, tag = 'scoped memory for tpu_custom_call.1']
    #allocation13 [shape = 'u8[8192]{0}', space=vmem, size = 0x2000, scoped, tag = 'output window, operand 2, single buffered']
    %16 = vsyncpa [#allocation3], 0
    %17 = vsyncpa [#allocation6], 0
    %18 = vsyncpa [#allocation9], 0
    %19 = vsyncpa [#allocation4], 0
    %20 = vsyncpa [#allocation12], 0
    // Predicated region
    $region2: #{tpu_custom_call.1} parent=1 // pred_check
      _
    $region3: #{tpu_custom_call.1} parent=1 // pred_check_branch
      %22 = sbr.rel (0) target = $region5
    $region4: #{tpu_custom_call.1} parent=1 // pred_region
      %s24 = ssub.s32 256, 256
      %25 = vsyncadd [#allocation3], %s24
      %s26 = sshll.u32 [#allocation2], 4
      %s27 = int_to_ptr.vmem [resolvable:$true] %s26
      %32 = dma.hbm_to_vmem [thread:$0]  %s0, 256, %s27, [#allocation3], 128, 128, 8
    $region5: #{tpu_custom_call.1} parent=1 // pred_fallthru
      _
    // Predicated region
    $region6: #{tpu_custom_call.1} parent=1 // pred_check
      _
    $region7: #{tpu_custom_call.1} parent=1 // pred_check_branch
      %34 = sbr.rel (0) target = $region9
    $region8: #{tpu_custom_call.1} parent=1 // pred_region
      %s36 = ssub.s32 4096, 4096
      %37 = vsyncadd [#allocation6], %s36
      %s38 = sshll.u32 [#allocation5], 4
      %s39 = int_to_ptr.vmem [resolvable:$true] %s38
      %44 = dma.hbm_to_vmem [thread:$0]  %s1, 4096, %s39, [#allocation6], 256, 256, 16
    $region9: #{tpu_custom_call.1} parent=1 // pred_fallthru
      _
    // Predicated region
    $region10: #{tpu_custom_call.1} parent=1 // pred_check
      _
    $region11: #{tpu_custom_call.1} parent=1 // pred_check_branch
      %46 = sbr.rel (0) target = $region13
    $region12: #{tpu_custom_call.1} parent=1 // pred_region
      _
    $region13: #{tpu_custom_call.1} parent=1 // pred_fallthru
      _
    // Predicated region
    $region14: #{tpu_custom_call.1} parent=1 // pred_check
      _
    $region15: #{tpu_custom_call.1} parent=1 // pred_check_branch
      %48 = sbr.rel (0) target = $region17
    $region16: #{tpu_custom_call.1} parent=1 // pred_region
      _
    $region17: #{tpu_custom_call.1} parent=1 // pred_fallthru
      _
    // Predicated region
    $region18: #{tpu_custom_call.1} parent=1 // pred_check
      _
    $region19: #{tpu_custom_call.1} parent=1 // pred_check_branch
      %50 = sbr.rel (0) target = $region21
    $region20: #{tpu_custom_call.1} parent=1 // pred_region
      _
    $region21: #{tpu_custom_call.1} parent=1 // pred_fallthru
      _
    // Predicated region
    $region22: #{tpu_custom_call.1} parent=1 // pred_check
      _
    $region23: #{tpu_custom_call.1} parent=1 // pred_check_branch
      %52 = sbr.rel (0) target = $region25
    $region24: #{tpu_custom_call.1} parent=1 // pred_region
      %s54 = ssub.s32 4096, 4096
      %55 = vsyncadd [#allocation6], %s54
      %s56 = sshll.u32 [#allocation7], 4
      %s57 = int_to_ptr.vmem [resolvable:$true] %s56
      %62 = dma.hbm_to_vmem [thread:$0]  %s5, 4096, %s57, [#allocation6], 128, 128, 8
    $region25: #{tpu_custom_call.1} parent=1 // pred_fallthru
      _
    // Predicated region
    $region26: #{tpu_custom_call.1} parent=1 // pred_check
      _
    $region27: #{tpu_custom_call.1} parent=1 // pred_check_branch
      %64 = sbr.rel (0) target = $region29
    $region28: #{tpu_custom_call.1} parent=1 // pred_region
      _
    $region29: #{tpu_custom_call.1} parent=1 // pred_fallthru
      _
    // Predicated region
    $region30: #{tpu_custom_call.1} parent=1 // pred_check
      _
    $region31: #{tpu_custom_call.1} parent=1 // pred_check_branch
      %66 = sbr.rel (0) target = $region33
    $region32: #{tpu_custom_call.1} parent=1 // pred_region
      %s68 = ssub.s32 8192, 8192
      %69 = vsyncadd [#allocation9], %s68
      %s70 = sshll.u32 [#allocation8], 4
      %s71 = int_to_ptr.vmem [resolvable:$true] %s70
      %76 = dma.hbm_to_vmem [thread:$0]  %s7, 8192, %s71, [#allocation9], 256, 256, 16
    $region33: #{tpu_custom_call.1} parent=1 // pred_fallthru
      _
    // Predicated region
    $region34: #{tpu_custom_call.1} parent=1 // pred_check
      _
    $region35: #{tpu_custom_call.1} parent=1 // pred_check_branch
      %78 = sbr.rel (0) target = $region37
    $region36: #{tpu_custom_call.1} parent=1 // pred_region
      %79 = dma.done [#allocation3], 256
    $region37: #{tpu_custom_call.1} parent=1 // pred_fallthru
      _
    // Predicated region
    $region38: #{tpu_custom_call.1} parent=1 // pred_check
      _
    $region39: #{tpu_custom_call.1} parent=1 // pred_check_branch
      %81 = sbr.rel (0) target = $region41
    $region40: #{tpu_custom_call.1} parent=1 // pred_region
      %82 = dma.done [#allocation6], 4096
    $region41: #{tpu_custom_call.1} parent=1 // pred_fallthru
      _
    // Predicated region
    $region42: #{tpu_custom_call.1} parent=1 // pred_check
      _
    $region43: #{tpu_custom_call.1} parent=1 // pred_check_branch
      %84 = sbr.rel (0) target = $region45
    $region44: #{tpu_custom_call.1} parent=1 // pred_region
      %85 = dma.done [#allocation6], 4096
    $region45: #{tpu_custom_call.1} parent=1 // pred_fallthru
      _
    // Predicated region
    $region46: #{tpu_custom_call.1} parent=1 // pred_check
      _
    $region47: #{tpu_custom_call.1} parent=1 // pred_check_branch
      %87 = sbr.rel (0) target = $region49
    $region48: #{tpu_custom_call.1} parent=1 // pred_region
      %88 = dma.done [#allocation9], 8192
    $region49: #{tpu_custom_call.1} parent=1 // pred_fallthru
      _
    %v89 = vld [vmem:[#allocation2] sm:$0xff]
    %v90 = vld [vmem:[#allocation2 + $0x8] sm:$0xff]
    %v91 = vld [vmem:[#allocation5] sm:$0xff]
    %v92 = vld [vmem:[#allocation5 + $0x8] sm:$0xff]
    %v93 = vld [vmem:[#allocation5 + $0x10] sm:$0xff]
    %v94 = vld [vmem:[#allocation5 + $0x18] sm:$0xff]
    %v95 = vld [vmem:[#allocation5 + $0x20] sm:$0xff]
    %v96 = vld [vmem:[#allocation5 + $0x28] sm:$0xff]
    %v97 = vld [vmem:[#allocation5 + $0x30] sm:$0xff]
    %v98 = vld [vmem:[#allocation5 + $0x38] sm:$0xff]
    %v99 = vld [vmem:[#allocation5 + $0x40] sm:$0xff]
    %v100 = vld [vmem:[#allocation5 + $0x48] sm:$0xff]
    %v101 = vld [vmem:[#allocation5 + $0x50] sm:$0xff]
    %v102 = vld [vmem:[#allocation5 + $0x58] sm:$0xff]
    %v103 = vld [vmem:[#allocation5 + $0x60] sm:$0xff]
    %v104 = vld [vmem:[#allocation5 + $0x68] sm:$0xff]
    %v105 = vld [vmem:[#allocation5 + $0x70] sm:$0xff]
    %v106 = vld [vmem:[#allocation5 + $0x78] sm:$0xff]
    %v107 = vld [vmem:[#allocation5 + $0x80] sm:$0xff]
    %v108 = vld [vmem:[#allocation5 + $0x88] sm:$0xff]
    %v109 = vld [vmem:[#allocation5 + $0x90] sm:$0xff]
    %v110 = vld [vmem:[#allocation5 + $0x98] sm:$0xff]
    %v111 = vld [vmem:[#allocation5 + $0xa0] sm:$0xff]
    %v112 = vld [vmem:[#allocation5 + $0xa8] sm:$0xff]
    %v113 = vld [vmem:[#allocation5 + $0xb0] sm:$0xff]
    %v114 = vld [vmem:[#allocation5 + $0xb8] sm:$0xff]
    %v115 = vld [vmem:[#allocation5 + $0xc0] sm:$0xff]
    %v116 = vld [vmem:[#allocation5 + $0xc8] sm:$0xff]
    %v117 = vld [vmem:[#allocation5 + $0xd0] sm:$0xff]
    %v118 = vld [vmem:[#allocation5 + $0xd8] sm:$0xff]
    %v119 = vld [vmem:[#allocation5 + $0xe0] sm:$0xff]
    %v120 = vld [vmem:[#allocation5 + $0xe8] sm:$0xff]
    %v121 = vld [vmem:[#allocation5 + $0xf0] sm:$0xff]
    %v122 = vld [vmem:[#allocation5 + $0xf8] sm:$0xff]
    %v123 = vld [vmem:[%s2] sm:$0x3]
    %v125 = vlaneseq
    %v126 = vshrl.u32 %v125, 7
    %v127 = vsub.s32 0, %v126
    %v128 = vrot.slane %v123, %v127
    %v129 = vlaneseq
    %v130 = vshrl.u32 %v129, 7
    %v131 = vsub.s32 1, %v130
    %v132 = vrot.slane %v123, %v131
    %135 = vmatprep.subr.mxu0 %v92
    %136 = vmatpush1.msra.mxu0 %v91
    %137 = vmatprep.subr.mxu0 %v94
    %138 = vmatpush1.msra.mxu0 %v93
    %139 = vmatprep.subr.mxu0 %v96
    %140 = vmatpush1.msra.mxu0 %v95
    %141 = vmatprep.subr.mxu0 %v98
    %142 = vmatpush1.msra.mxu0 %v97
    %143 = vmatprep.subr.mxu0 %v100
    %144 = vmatpush1.msra.mxu0 %v99
    %145 = vmatprep.subr.mxu0 %v102
    %146 = vmatpush1.msra.mxu0 %v101
    %147 = vmatprep.subr.mxu0 %v104
    %148 = vmatpush1.msra.mxu0 %v103
    %149 = vmatprep.subr.mxu0 %v106
    %150 = vmatpush1.msra.mxu0 %v105
    %151 = vmatprep.subr.mxu0 %v108
    %152 = vmatpush1.msra.mxu0 %v107
    %153 = vmatprep.subr.mxu0 %v110
    %154 = vmatpush1.msra.mxu0 %v109
    %155 = vmatprep.subr.mxu0 %v112
    %156 = vmatpush1.msra.mxu0 %v111
    %157 = vmatprep.subr.mxu0 %v114
    %158 = vmatpush1.msra.mxu0 %v113
    %159 = vmatprep.subr.mxu0 %v116
    %160 = vmatpush1.msra.mxu0 %v115
    %161 = vmatprep.subr.mxu0 %v118
    %162 = vmatpush1.msra.mxu0 %v117
    %163 = vmatprep.subr.mxu0 %v120
    %164 = vmatpush1.msra.mxu0 %v119
    %165 = vmatprep.subr.mxu0 %v122
    %166 = vmatpush1.msra.mxu0 %v121
    %167 = vmatprep.subr.mxu0 0.0
    %168 = vmatpush1.msra.mxu0 0.0
    %169 = vmatprep.subr.mxu0 0.0
    %170 = vmatpush1.msra.mxu0 0.0
    %171 = vmatprep.subr.mxu0 0.0
    %172 = vmatpush1.msra.mxu0 0.0
    %173 = vmatprep.subr.mxu0 0.0
    %174 = vmatpush1.msra.mxu0 0.0
    %175 = vmatprep.subr.mxu0 0.0
    %176 = vmatpush1.msra.mxu0 0.0
    %177 = vmatprep.subr.mxu0 0.0
    %178 = vmatpush1.msra.mxu0 0.0
    %179 = vmatprep.subr.mxu0 0.0
    %180 = vmatpush1.msra.mxu0 0.0
    %181 = vmatprep.subr.mxu0 0.0
    %182 = vmatpush1.msra.mxu0 0.0
    %183 = vmatprep.subr.mxu0 0.0
    %184 = vmatpush1.msra.mxu0 0.0
    %185 = vmatprep.subr.mxu0 0.0
    %186 = vmatpush1.msra.mxu0 0.0
    %187 = vmatprep.subr.mxu0 0.0
    %188 = vmatpush1.msra.mxu0 0.0
    %189 = vmatprep.subr.mxu0 0.0
    %190 = vmatpush1.msra.mxu0 0.0
    %191 = vmatprep.subr.mxu0 0.0
    %192 = vmatpush1.msra.mxu0 0.0
    %193 = vmatprep.subr.mxu0 0.0
    %194 = vmatpush1.msra.mxu0 0.0
    %195 = vmatprep.subr.mxu0 0.0
    %196 = vmatpush1.msra.mxu0 0.0
    %197 = vmatprep.subr.mxu0 0.0
    %198 = vmatpush1.msra.mxu0 0.0
    %199 = vmatprep.mubr.f32.mxu0 0.0
    %200 = vmatmul.mubr.f32.gmra.mrb[0].mxu0 %v89
    %v201 = vpop.f32.mrb[0].mxu0
    %v202 = vadd.f32 %v128, %v201
    %v203 = vpop.f32.mrb[0].mxu0
    %v204 = vadd.f32 %v132, %v203
    %205 = vmatprep.mubr.f32.mxu0 0.0
    %206 = vmatmul.mubr.f32.gmra.mrb[0].mxu0 %v90
    %v207 = vpop.f32.mrb[0].mxu0
    %v208 = vadd.f32 %v128, %v207
    %v209 = vpop.f32.mrb[0].mxu0
    %v210 = vadd.f32 %v132, %v209
    %211 = vdwg.mxu0
    %v212 = vld [vmem:[#allocation8] sm:$0xff]
    %v213 = vld [vmem:[#allocation8 + $0x8] sm:$0xff]
    %v214 = vld [vmem:[#allocation8 + $0x10] sm:$0xff]
    %v215 = vld [vmem:[#allocation8 + $0x18] sm:$0xff]
    %v216 = vld [vmem:[#allocation8 + $0x20] sm:$0xff]
    %v217 = vld [vmem:[#allocation8 + $0x28] sm:$0xff]
    %v218 = vld [vmem:[#allocation8 + $0x30] sm:$0xff]
    %v219 = vld [vmem:[#allocation8 + $0x38] sm:$0xff]
    %v220 = vld [vmem:[#allocation8 + $0x40] sm:$0xff]
    %v221 = vld [vmem:[#allocation8 + $0x48] sm:$0xff]
    %v222 = vld [vmem:[#allocation8 + $0x50] sm:$0xff]
    %v223 = vld [vmem:[#allocation8 + $0x58] sm:$0xff]
    %v224 = vld [vmem:[#allocation8 + $0x60] sm:$0xff]
    %v225 = vld [vmem:[#allocation8 + $0x68] sm:$0xff]
    %v226 = vld [vmem:[#allocation8 + $0x70] sm:$0xff]
    %v227 = vld [vmem:[#allocation8 + $0x78] sm:$0xff]
    %v228 = vld [vmem:[#allocation8 + $0x80] sm:$0xff]
    %v229 = vld [vmem:[#allocation8 + $0x88] sm:$0xff]
    %v230 = vld [vmem:[#allocation8 + $0x90] sm:$0xff]
    %v231 = vld [vmem:[#allocation8 + $0x98] sm:$0xff]
    %v232 = vld [vmem:[#allocation8 + $0xa0] sm:$0xff]
    %v233 = vld [vmem:[#allocation8 + $0xa8] sm:$0xff]
    %v234 = vld [vmem:[#allocation8 + $0xb0] sm:$0xff]
    %v235 = vld [vmem:[#allocation8 + $0xb8] sm:$0xff]
    %v236 = vld [vmem:[#allocation8 + $0xc0] sm:$0xff]
    %v237 = vld [vmem:[#allocation8 + $0xc8] sm:$0xff]
    %v238 = vld [vmem:[#allocation8 + $0xd0] sm:$0xff]
    %v239 = vld [vmem:[#allocation8 + $0xd8] sm:$0xff]
    %v240 = vld [vmem:[#allocation8 + $0xe0] sm:$0xff]
    %v241 = vld [vmem:[#allocation8 + $0xe8] sm:$0xff]
    %v242 = vld [vmem:[#allocation8 + $0xf0] sm:$0xff]
    %v243 = vld [vmem:[#allocation8 + $0xf8] sm:$0xff]
    %v244 = vld [vmem:[#allocation8 + $0x100] sm:$0xff]
    %v245 = vld [vmem:[#allocation8 + $0x108] sm:$0xff]
    %v246 = vld [vmem:[#allocation8 + $0x110] sm:$0xff]
    %v247 = vld [vmem:[#allocation8 + $0x118] sm:$0xff]
    %v248 = vld [vmem:[#allocation8 + $0x120] sm:$0xff]
    %v249 = vld [vmem:[#allocation8 + $0x128] sm:$0xff]
    %v250 = vld [vmem:[#allocation8 + $0x130] sm:$0xff]
    %v251 = vld [vmem:[#allocation8 + $0x138] sm:$0xff]
    %v252 = vld [vmem:[#allocation8 + $0x140] sm:$0xff]
    %v253 = vld [vmem:[#allocation8 + $0x148] sm:$0xff]
    %v254 = vld [vmem:[#allocation8 + $0x150] sm:$0xff]
    %v255 = vld [vmem:[#allocation8 + $0x158] sm:$0xff]
    %v256 = vld [vmem:[#allocation8 + $0x160] sm:$0xff]
    %v257 = vld [vmem:[#allocation8 + $0x168] sm:$0xff]
    %v258 = vld [vmem:[#allocation8 + $0x170] sm:$0xff]
    %v259 = vld [vmem:[#allocation8 + $0x178] sm:$0xff]
    %v260 = vld [vmem:[#allocation8 + $0x180] sm:$0xff]
    %v261 = vld [vmem:[#allocation8 + $0x188] sm:$0xff]
    %v262 = vld [vmem:[#allocation8 + $0x190] sm:$0xff]
    %v263 = vld [vmem:[#allocation8 + $0x198] sm:$0xff]
    %v264 = vld [vmem:[#allocation8 + $0x1a0] sm:$0xff]
    %v265 = vld [vmem:[#allocation8 + $0x1a8] sm:$0xff]
    %v266 = vld [vmem:[#allocation8 + $0x1b0] sm:$0xff]
    %v267 = vld [vmem:[#allocation8 + $0x1b8] sm:$0xff]
    %v268 = vld [vmem:[#allocation8 + $0x1c0] sm:$0xff]
    %v269 = vld [vmem:[#allocation8 + $0x1c8] sm:$0xff]
    %v270 = vld [vmem:[#allocation8 + $0x1d0] sm:$0xff]
    %v271 = vld [vmem:[#allocation8 + $0x1d8] sm:$0xff]
    %v272 = vld [vmem:[#allocation8 + $0x1e0] sm:$0xff]
    %v273 = vld [vmem:[#allocation8 + $0x1e8] sm:$0xff]
    %v274 = vld [vmem:[#allocation8 + $0x1f0] sm:$0xff]
    %v275 = vld [vmem:[#allocation8 + $0x1f8] sm:$0xff]
    %276 = vmatprep.subr.mxu0 %v213
    %277 = vmatpush1.msra.mxu0 %v212
    %278 = vmatprep.subr.mxu0 %v215
    %279 = vmatpush1.msra.mxu0 %v214
    %280 = vmatprep.subr.mxu0 %v217
    %281 = vmatpush1.msra.mxu0 %v216
    %282 = vmatprep.subr.mxu0 %v219
    %283 = vmatpush1.msra.mxu0 %v218
    %284 = vmatprep.subr.mxu0 %v221
    %285 = vmatpush1.msra.mxu0 %v220
    %286 = vmatprep.subr.mxu0 %v223
    %287 = vmatpush1.msra.mxu0 %v222
    %288 = vmatprep.subr.mxu0 %v225
    %289 = vmatpush1.msra.mxu0 %v224
    %290 = vmatprep.subr.mxu0 %v227
    %291 = vmatpush1.msra.mxu0 %v226
    %292 = vmatprep.subr.mxu0 %v229
    %293 = vmatpush1.msra.mxu0 %v228
    %294 = vmatprep.subr.mxu0 %v231
    %295 = vmatpush1.msra.mxu0 %v230
    %296 = vmatprep.subr.mxu0 %v233
    %297 = vmatpush1.msra.mxu0 %v232
    %298 = vmatprep.subr.mxu0 %v235
    %299 = vmatpush1.msra.mxu0 %v234
    %300 = vmatprep.subr.mxu0 %v237
    %301 = vmatpush1.msra.mxu0 %v236
    %302 = vmatprep.subr.mxu0 %v239
    %303 = vmatpush1.msra.mxu0 %v238
    %304 = vmatprep.subr.mxu0 %v241
    %305 = vmatpush1.msra.mxu0 %v240
    %306 = vmatprep.subr.mxu0 %v243
    %307 = vmatpush1.msra.mxu0 %v242
    %308 = vmatprep.subr.mxu0 %v245
    %309 = vmatpush1.msra.mxu0 %v244
    %310 = vmatprep.subr.mxu0 %v247
    %311 = vmatpush1.msra.mxu0 %v246
    %312 = vmatprep.subr.mxu0 %v249
    %313 = vmatpush1.msra.mxu0 %v248
    %314 = vmatprep.subr.mxu0 %v251
    %315 = vmatpush1.msra.mxu0 %v250
    %316 = vmatprep.subr.mxu0 %v253
    %317 = vmatpush1.msra.mxu0 %v252
    %318 = vmatprep.subr.mxu0 %v255
    %319 = vmatpush1.msra.mxu0 %v254
    %320 = vmatprep.subr.mxu0 %v257
    %321 = vmatpush1.msra.mxu0 %v256
    %322 = vmatprep.subr.mxu0 %v259
    %323 = vmatpush1.msra.mxu0 %v258
    %324 = vmatprep.subr.mxu0 %v261
    %325 = vmatpush1.msra.mxu0 %v260
    %326 = vmatprep.subr.mxu0 %v263
    %327 = vmatpush1.msra.mxu0 %v262
    %328 = vmatprep.subr.mxu0 %v265
    %329 = vmatpush1.msra.mxu0 %v264
    %330 = vmatprep.subr.mxu0 %v267
    %331 = vmatpush1.msra.mxu0 %v266
    %332 = vmatprep.subr.mxu0 %v269
    %333 = vmatpush1.msra.mxu0 %v268
    %334 = vmatprep.subr.mxu0 %v271
    %335 = vmatpush1.msra.mxu0 %v270
    %336 = vmatprep.subr.mxu0 %v273
    %337 = vmatpush1.msra.mxu0 %v272
    %338 = vmatprep.subr.mxu0 %v275
    %339 = vmatpush1.msra.mxu0 %v274
    %340 = vmatprep.mubr.f32.mxu0 %v204
    %341 = vmatmul.mubr.f32.gmra.mrb[0].mxu0 %v202
    %v342 = vpop.f32.mrb[0].mxu0
    %v343 = vadd.f32 0.0, %v342
    %v344 = vpop.f32.mrb[0].mxu0
    %v345 = vadd.f32 0.0, %v344
    %346 = vmatprep.mubr.f32.mxu0 %v210
    %347 = vmatmul.mubr.f32.gmra.mrb[0].mxu0 %v208
    %v348 = vpop.f32.mrb[0].mxu0
    %v349 = vadd.f32 0.0, %v348
    %v350 = vpop.f32.mrb[0].mxu0
    %v351 = vadd.f32 0.0, %v350
    %352 = vdwg.mxu0
    %v353 = vmul.f32 %v202, %v202
    %v354 = vmul.f32 %v204, %v204
    %v355 = vmul.f32 %v208, %v208
    %v356 = vmul.f32 %v210, %v210
    %357 = vmatprep.subr.mxu0 %v213
    %358 = vmatpush1.msra.mxu0 %v212
    %359 = vmatprep.subr.mxu0 %v215
    %360 = vmatpush1.msra.mxu0 %v214
    %361 = vmatprep.subr.mxu0 %v217
    %362 = vmatpush1.msra.mxu0 %v216
    %363 = vmatprep.subr.mxu0 %v219
    %364 = vmatpush1.msra.mxu0 %v218
    %365 = vmatprep.subr.mxu0 %v221
    %366 = vmatpush1.msra.mxu0 %v220
    %367 = vmatprep.subr.mxu0 %v223
    %368 = vmatpush1.msra.mxu0 %v222
    %369 = vmatprep.subr.mxu0 %v225
    %370 = vmatpush1.msra.mxu0 %v224
    %371 = vmatprep.subr.mxu0 %v227
    %372 = vmatpush1.msra.mxu0 %v226
    %373 = vmatprep.subr.mxu0 %v229
    %374 = vmatpush1.msra.mxu0 %v228
    %375 = vmatprep.subr.mxu0 %v231
    %376 = vmatpush1.msra.mxu0 %v230
    %377 = vmatprep.subr.mxu0 %v233
    %378 = vmatpush1.msra.mxu0 %v232
    %379 = vmatprep.subr.mxu0 %v235
    %380 = vmatpush1.msra.mxu0 %v234
    %381 = vmatprep.subr.mxu0 %v237
    %382 = vmatpush1.msra.mxu0 %v236
    %383 = vmatprep.subr.mxu0 %v239
    %384 = vmatpush1.msra.mxu0 %v238
    %385 = vmatprep.subr.mxu0 %v241
    %386 = vmatpush1.msra.mxu0 %v240
    %387 = vmatprep.subr.mxu0 %v243
    %388 = vmatpush1.msra.mxu0 %v242
    %389 = vmatprep.subr.mxu0 %v245
    %390 = vmatpush1.msra.mxu0 %v244
    %391 = vmatprep.subr.mxu0 %v247
    %392 = vmatpush1.msra.mxu0 %v246
    %393 = vmatprep.subr.mxu0 %v249
    %394 = vmatpush1.msra.mxu0 %v248
    %395 = vmatprep.subr.mxu0 %v251
    %396 = vmatpush1.msra.mxu0 %v250
    %397 = vmatprep.subr.mxu0 %v253
    %398 = vmatpush1.msra.mxu0 %v252
    %399 = vmatprep.subr.mxu0 %v255
    %400 = vmatpush1.msra.mxu0 %v254
    %401 = vmatprep.subr.mxu0 %v257
    %402 = vmatpush1.msra.mxu0 %v256
    %403 = vmatprep.subr.mxu0 %v259
    %404 = vmatpush1.msra.mxu0 %v258
    %405 = vmatprep.subr.mxu0 %v261
    %406 = vmatpush1.msra.mxu0 %v260
    %407 = vmatprep.subr.mxu0 %v263
    %408 = vmatpush1.msra.mxu0 %v262
    %409 = vmatprep.subr.mxu0 %v265
    %410 = vmatpush1.msra.mxu0 %v264
    %411 = vmatprep.subr.mxu0 %v267
    %412 = vmatpush1.msra.mxu0 %v266
    %413 = vmatprep.subr.mxu0 %v269
    %414 = vmatpush1.msra.mxu0 %v268
    %415 = vmatprep.subr.mxu0 %v271
    %416 = vmatpush1.msra.mxu0 %v270
    %417 = vmatprep.subr.mxu0 %v273
    %418 = vmatpush1.msra.mxu0 %v272
    %419 = vmatprep.subr.mxu0 %v275
    %420 = vmatpush1.msra.mxu0 %v274
    %421 = vmatprep.mubr.f32.mxu0 %v354
    %422 = vmatmul.mubr.f32.gmra.mrb[0].mxu0 %v353
    %v423 = vpop.f32.mrb[0].mxu0
    %v424 = vadd.f32 0.0, %v423
    %v425 = vpop.f32.mrb[0].mxu0
    %v426 = vadd.f32 0.0, %v425
    %427 = vmatprep.mubr.f32.mxu0 %v356
    %428 = vmatmul.mubr.f32.gmra.mrb[0].mxu0 %v355
    %v429 = vpop.f32.mrb[0].mxu0
    %v430 = vadd.f32 0.0, %v429
    %v431 = vpop.f32.mrb[0].mxu0
    %v432 = vadd.f32 0.0, %v431
    %433 = vdwg.mxu0
    %v434 = vmul.f32 %v343, %v343
    %v435 = vmul.f32 %v345, %v345
    %v436 = vmul.f32 %v349, %v349
    %v437 = vmul.f32 %v351, %v351
    %v438 = vsub.f32 %v424, %v434
    %v439 = vsub.f32 %v426, %v435
    %v440 = vsub.f32 %v430, %v436
    %v441 = vsub.f32 %v432, %v437
    %v442 = vmax.f32 %v438, 0.0
    %v443 = vmax.f32 %v439, 0.0
    %v444 = vmax.f32 %v440, 0.0
    %v445 = vmax.f32 %v441, 0.0
    %v446 = vadd.f32 %v442, 1e-05
    %v447 = vadd.f32 %v443, 1e-05
    %v448 = vadd.f32 %v444, 1e-05
    %v449 = vadd.f32 %v445, 1e-05
    %v450 = vrsqrt.pop %v446
    %v451 = vrsqrt.pop %v447
    %v452 = vrsqrt.pop %v448
    %v453 = vrsqrt.pop %v449
    %v454 = vsub.f32 %v202, %v343
    %v455 = vsub.f32 %v204, %v345
    %v456 = vsub.f32 %v208, %v349
    %v457 = vsub.f32 %v210, %v351
    %v458 = vmul.f32 %v454, %v450
    %v459 = vmul.f32 %v455, %v451
    %v460 = vmul.f32 %v456, %v452
    %v461 = vmul.f32 %v457, %v453
    %v462 = vld [vmem:[%s3] sm:$0x3]
    %v464 = vlaneseq
    %v465 = vshrl.u32 %v464, 7
    %v466 = vsub.s32 0, %v465
    %v467 = vrot.slane %v462, %v466
    %v468 = vlaneseq
    %v469 = vshrl.u32 %v468, 7
    %v470 = vsub.s32 1, %v469
    %v471 = vrot.slane %v462, %v470
    %v474 = vmul.f32 %v458, %v467
    %v475 = vmul.f32 %v459, %v471
    %v476 = vmul.f32 %v460, %v467
    %v477 = vmul.f32 %v461, %v471
    %v478 = vld [vmem:[%s4] sm:$0x3]
    %v480 = vlaneseq
    %v481 = vshrl.u32 %v480, 7
    %v482 = vsub.s32 0, %v481
    %v483 = vrot.slane %v478, %v482
    %v484 = vlaneseq
    %v485 = vshrl.u32 %v484, 7
    %v486 = vsub.s32 1, %v485
    %v487 = vrot.slane %v478, %v486
    %v490 = vadd.f32 %v474, %v483
    %v491 = vadd.f32 %v475, %v487
    %v492 = vadd.f32 %v476, %v483
    %v493 = vadd.f32 %v477, %v487
    %494 = vst [vmem:[#allocation10] sm:$0xff] %v490
    %495 = vst [vmem:[#allocation10 + $0x8] sm:$0xff] %v491
    %496 = vst [vmem:[#allocation10 + $0x10] sm:$0xff] %v492
    %497 = vst [vmem:[#allocation10 + $0x18] sm:$0xff] %v493
    %v498 = vld [vmem:[#allocation7] sm:$0xff]
    %v499 = vld [vmem:[#allocation7 + $0x8] sm:$0xff]
    %v500 = vld [vmem:[#allocation7 + $0x10] sm:$0xff]
    %v501 = vld [vmem:[#allocation7 + $0x18] sm:$0xff]
    %v502 = vld [vmem:[#allocation7 + $0x20] sm:$0xff]
    %v503 = vld [vmem:[#allocation7 + $0x28] sm:$0xff]
    %v504 = vld [vmem:[#allocation7 + $0x30] sm:$0xff]
    %v505 = vld [vmem:[#allocation7 + $0x38] sm:$0xff]
    %v506 = vld [vmem:[#allocation7 + $0x40] sm:$0xff]
    %v507 = vld [vmem:[#allocation7 + $0x48] sm:$0xff]
    %v508 = vld [vmem:[#allocation7 + $0x50] sm:$0xff]
    %v509 = vld [vmem:[#allocation7 + $0x58] sm:$0xff]
    %v510 = vld [vmem:[#allocation7 + $0x60] sm:$0xff]
    %v511 = vld [vmem:[#allocation7 + $0x68] sm:$0xff]
    %v512 = vld [vmem:[#allocation7 + $0x70] sm:$0xff]
    %v513 = vld [vmem:[#allocation7 + $0x78] sm:$0xff]
    %v514 = vld [vmem:[#allocation7 + $0x80] sm:$0xff]
    %v515 = vld [vmem:[#allocation7 + $0x88] sm:$0xff]
    %v516 = vld [vmem:[#allocation7 + $0x90] sm:$0xff]
    %v517 = vld [vmem:[#allocation7 + $0x98] sm:$0xff]
    %v518 = vld [vmem:[#allocation7 + $0xa0] sm:$0xff]
    %v519 = vld [vmem:[#allocation7 + $0xa8] sm:$0xff]
    %v520 = vld [vmem:[#allocation7 + $0xb0] sm:$0xff]
    %v521 = vld [vmem:[#allocation7 + $0xb8] sm:$0xff]
    %v522 = vld [vmem:[#allocation7 + $0xc0] sm:$0xff]
    %v523 = vld [vmem:[#allocation7 + $0xc8] sm:$0xff]
    %v524 = vld [vmem:[#allocation7 + $0xd0] sm:$0xff]
    %v525 = vld [vmem:[#allocation7 + $0xd8] sm:$0xff]
    %v526 = vld [vmem:[#allocation7 + $0xe0] sm:$0xff]
    %v527 = vld [vmem:[#allocation7 + $0xe8] sm:$0xff]
    %v528 = vld [vmem:[#allocation7 + $0xf0] sm:$0xff]
    %v529 = vld [vmem:[#allocation7 + $0xf8] sm:$0xff]
    %v530 = vld [vmem:[%s6] sm:$0x1]
    %v532 = vlaneseq
    %v533 = vshrl.u32 %v532, 7
    %v534 = vsub.s32 0, %v533
    %v535 = vrot.slane %v530, %v534
    %537 = vmatprep.subr.mxu0 0.0
    %538 = vmatpush1.msra.mxu0 %v498
    %539 = vmatprep.subr.mxu0 0.0
    %540 = vmatpush1.msra.mxu0 %v499
    %541 = vmatprep.subr.mxu0 0.0
    %542 = vmatpush1.msra.mxu0 %v500
    %543 = vmatprep.subr.mxu0 0.0
    %544 = vmatpush1.msra.mxu0 %v501
    %545 = vmatprep.subr.mxu0 0.0
    %546 = vmatpush1.msra.mxu0 %v502
    %547 = vmatprep.subr.mxu0 0.0
    %548 = vmatpush1.msra.mxu0 %v503
    %549 = vmatprep.subr.mxu0 0.0
    %550 = vmatpush1.msra.mxu0 %v504
    %551 = vmatprep.subr.mxu0 0.0
    %552 = vmatpush1.msra.mxu0 %v505
    %553 = vmatprep.subr.mxu0 0.0
    %554 = vmatpush1.msra.mxu0 %v506
    %555 = vmatprep.subr.mxu0 0.0
    %556 = vmatpush1.msra.mxu0 %v507
    %557 = vmatprep.subr.mxu0 0.0
    %558 = vmatpush1.msra.mxu0 %v508
    %559 = vmatprep.subr.mxu0 0.0
    %560 = vmatpush1.msra.mxu0 %v509
    %561 = vmatprep.subr.mxu0 0.0
    %562 = vmatpush1.msra.mxu0 %v510
    %563 = vmatprep.subr.mxu0 0.0
    %564 = vmatpush1.msra.mxu0 %v511
    %565 = vmatprep.subr.mxu0 0.0
    %566 = vmatpush1.msra.mxu0 %v512
    %567 = vmatprep.subr.mxu0 0.0
    %568 = vmatpush1.msra.mxu0 %v513
    %569 = vmatprep.subr.mxu0 0.0
    %570 = vmatpush1.msra.mxu0 %v514
    %571 = vmatprep.subr.mxu0 0.0
    %572 = vmatpush1.msra.mxu0 %v515
    %573 = vmatprep.subr.mxu0 0.0
    %574 = vmatpush1.msra.mxu0 %v516
    %575 = vmatprep.subr.mxu0 0.0
    %576 = vmatpush1.msra.mxu0 %v517
    %577 = vmatprep.subr.mxu0 0.0
    %578 = vmatpush1.msra.mxu0 %v518
    %579 = vmatprep.subr.mxu0 0.0
    %580 = vmatpush1.msra.mxu0 %v519
    %581 = vmatprep.subr.mxu0 0.0
    %582 = vmatpush1.msra.mxu0 %v520
    %583 = vmatprep.subr.mxu0 0.0
    %584 = vmatpush1.msra.mxu0 %v521
    %585 = vmatprep.subr.mxu0 0.0
    %586 = vmatpush1.msra.mxu0 %v522
    %587 = vmatprep.subr.mxu0 0.0
    %588 = vmatpush1.msra.mxu0 %v523
    %589 = vmatprep.subr.mxu0 0.0
    %590 = vmatpush1.msra.mxu0 %v524
    %591 = vmatprep.subr.mxu0 0.0
    %592 = vmatpush1.msra.mxu0 %v525
    %593 = vmatprep.subr.mxu0 0.0
    %594 = vmatpush1.msra.mxu0 %v526
    %595 = vmatprep.subr.mxu0 0.0
    %596 = vmatpush1.msra.mxu0 %v527
    %597 = vmatprep.subr.mxu0 0.0
    %598 = vmatpush1.msra.mxu0 %v528
    %599 = vmatprep.subr.mxu0 0.0
    %600 = vmatpush1.msra.mxu0 %v529
    %601 = vmatprep.mubr.f32.mxu0 %v491
    %602 = vmatmul.mubr.f32.gmra.mrb[0].mxu0 %v490
    %v603 = vpop.f32.mrb[0].mxu0
    %v604 = vadd.f32 %v535, %v603
    %v605 = vpop.f32.mrb[0].mxu0
    %606 = vmatprep.mubr.f32.mxu0 %v493
    %607 = vmatmul.mubr.f32.gmra.mrb[0].mxu0 %v492
    %v608 = vpop.f32.mrb[0].mxu0
    %v609 = vadd.f32 %v535, %v608
    %v610 = vpop.f32.mrb[0].mxu0
    %611 = vdwg.mxu0
    %612 = vst [vmem:[#allocation11] sm:$0xff] %v604
    %613 = vst [vmem:[#allocation11 + $0x8] sm:$0xff] %v609
    %614 = vmax.xlane.f32.xlu0 %v604
    %v615 = vpop.xlane.xlu0 %614
    %616 = vmax.xlane.f32.xlu0 %v609
    %v617 = vpop.xlane.xlu0 %616
    %v618 = vsub.f32 %v604, %v615
    %v619 = vsub.f32 %v609, %v617
    %v620 = vmul.f32 %v618, 1.442695
    %v621 = vpow.pop %v620
    %v622 = vmul.f32 %v619, 1.442695
    %v623 = vpow.pop %v622
    %624 = vadd.xlane.f32.xlu0 %v621
    %v625 = vpop.xlane.xlu0 %624
    %626 = vadd.xlane.f32.xlu0 %v623
    %v627 = vpop.xlane.xlu0 %626
    %v628 = vrcp.pop %v625
    %v629 = vmul.f32 %v621, %v628
    %v630 = vrcp.pop %v627
    %v631 = vmul.f32 %v623, %v630
    %632 = vst [vmem:[#allocation13] sm:$0xff] %v629
    %633 = vst [vmem:[#allocation13 + $0x8] sm:$0xff] %v631
    // Predicated region
    $region50: #{tpu_custom_call.1} parent=1 // pred_check
      _
    $region51: #{tpu_custom_call.1} parent=1 // pred_check_branch
      %635 = sbr.rel (0) target = $region53
    $region52: #{tpu_custom_call.1} parent=1 // pred_region
      %s637 = ssub.s32 512, 512
      %638 = vsyncadd [#allocation4], %s637
      %s639 = sshll.u32 [#allocation10], 4
      %s640 = int_to_ptr.vmem [resolvable:$true] %s639
      %645 = dma.vmem_to_hbm [thread:$0]  %s640, 512, %s8, [#allocation4], 256, 256, 16
    $region53: #{tpu_custom_call.1} parent=1 // pred_fallthru
      _
    // Predicated region
    $region54: #{tpu_custom_call.1} parent=1 // pred_check
      _
    $region55: #{tpu_custom_call.1} parent=1 // pred_check_branch
      %647 = sbr.rel (0) target = $region57
    $region56: #{tpu_custom_call.1} parent=1 // pred_region
      %s649 = ssub.s32 256, 256
      %650 = vsyncadd [#allocation12], %s649
      %s651 = sshll.u32 [#allocation11], 4
      %s652 = int_to_ptr.vmem [resolvable:$true] %s651
      %657 = dma.vmem_to_hbm [thread:$0]  %s652, 256, %s9, [#allocation12], 128, 128, 8
    $region57: #{tpu_custom_call.1} parent=1 // pred_fallthru
      _
    // Predicated region
    $region58: #{tpu_custom_call.1} parent=1 // pred_check
      _
    $region59: #{tpu_custom_call.1} parent=1 // pred_check_branch
      %659 = sbr.rel (0) target = $region61
    $region60: #{tpu_custom_call.1} parent=1 // pred_region
      %s661 = ssub.s32 256, 256
      %662 = vsyncadd [#allocation12], %s661
      %s663 = sshll.u32 [#allocation13], 4
      %s664 = int_to_ptr.vmem [resolvable:$true] %s663
      %669 = dma.vmem_to_hbm [thread:$0]  %s664, 256, %s10, [#allocation12], 128, 128, 8
    $region61: #{tpu_custom_call.1} parent=1 // pred_fallthru
      _
    // Predicated region
    $region62: #{tpu_custom_call.1} parent=1 // pred_check
      _
    $region63: #{tpu_custom_call.1} parent=1 // pred_check_branch
      %671 = sbr.rel (0) target = $region65
    $region64: #{tpu_custom_call.1} parent=1 // pred_region
      %672 = dma.done [#allocation4], 512
    $region65: #{tpu_custom_call.1} parent=1 // pred_fallthru
      _
    // Predicated region
    $region66: #{tpu_custom_call.1} parent=1 // pred_check
      _
    $region67: #{tpu_custom_call.1} parent=1 // pred_check_branch
      %674 = sbr.rel (0) target = $region69
    $region68: #{tpu_custom_call.1} parent=1 // pred_region
      %675 = dma.done [#allocation12], 256
    $region69: #{tpu_custom_call.1} parent=1 // pred_fallthru
      _
    // Predicated region
    $region70: #{tpu_custom_call.1} parent=1 // pred_check
      _
    $region71: #{tpu_custom_call.1} parent=1 // pred_check_branch
      %677 = sbr.rel (0) target = $region73
    $region72: #{tpu_custom_call.1} parent=1 // pred_region
      %678 = dma.done [#allocation12], 256
    $region73: #{tpu_custom_call.1} parent=1 // pred_fallthru
      _
    %679 = vsyncpa [#allocation3], 1
    %680 = vsyncpa [#allocation6], 1
    %681 = vsyncpa [#allocation9], 1
    %682 = vsyncpa [#allocation4], 1
    %683 = vsyncpa [#allocation12], 1

</llo_original>
